<compile_context>
chip_gen: v7x
topology: tpu7x:2x2x1
jax: 0.10.0
libtpu: 0.0.40
codegen_flags: <defaults>
</compile_context>

<pallas_src>
import functools

import jax
import jax.numpy as jnp
from jax.experimental import pallas as pl
from jax.experimental.pallas import tpu as pltpu

F_PAD = 128  # lane-dense padded output width (full unmasked vst stores)


def _linear_sigmoid_kernel(x_ref, w_ref, b_ref, o_ref):
    x = x_ref[...]            # [N, F_in]
    w = w_ref[...]            # [F_in, F_PAD]
    # Single MXU matmul; accumulate in f32.
    y = jnp.dot(x, w, preferred_element_type=jnp.float32) + b_ref[...]
    # sigmoid(y) = 0.5 * (tanh(y/2) + 1): one EUP op, no VPU divide.
    # NOTE: padded lanes f_out..127 evaluate to sigmoid(0) = 0.5; the jitted
    # wrapper slices them off before anything downstream sees them.
    o_ref[...] = (0.5 * (jnp.tanh(0.5 * y) + 1.0)).astype(o_ref.dtype)
    # TODO(synk): on v6e/v7x at large N, cast to bfloat16 here (and change
    # out_shape dtype) to halve HBM writeback; keep f32 on v5e.


def init_padded_params(w, b):
    """One-time parameter prep (hoisted out of the per-call forward path).

    w: [F_out, F_in] f32 (PyTorch nn.Linear layout), b: [F_out] f32
    -> (w_pad [F_in, F_PAD] f32, b_pad [1, F_PAD] f32)
    """
    f_out, f_in = w.shape
    w_pad = jnp.zeros((f_in, F_PAD), jnp.float32).at[:, :f_out].set(w.T)
    b_pad = jnp.zeros((1, F_PAD), jnp.float32).at[0, :f_out].set(b)
    return w_pad, b_pad


@functools.partial(jax.jit, static_argnames=("f_out",))
def dummy_model_forward(x, w_pad, b_pad, *, f_out=10):
    """x: [N, F_in] f32, w_pad: [F_in, F_PAD] f32, b_pad: [1, F_PAD] f32
    -> [N, f_out] f32 == sigmoid(x @ W^T + b)."""
    n, f_in = x.shape

    vmem_spec = pl.BlockSpec(memory_space=pltpu.MemorySpace.VMEM)

    cost = pl.CostEstimate(
        flops=2 * n * f_in * F_PAD,
        transcendentals=n * F_PAD,
        bytes_accessed=4 * (n * f_in + f_in * F_PAD + F_PAD + n * F_PAD),
    )

    out_pad = pl.pallas_call(
        _linear_sigmoid_kernel,
        out_shape=jax.ShapeDtypeStruct((n, F_PAD), jnp.float32),
        in_specs=[vmem_spec, vmem_spec, vmem_spec],
        out_specs=vmem_spec,
        cost_estimate=cost,
    )(x, w_pad, b_pad)

    # Fused inside this jit; not a standalone copy kernel.
    return out_pad[:, :f_out]

    # TODO(synk): if N ever grows to realistic batch sizes, add a 1-D row grid
    # (TILE_N multiple of 8, ~1024-4096) with
    # compiler_params=pltpu.CompilerParams(dimension_semantics=("parallel",))
    # so both v7x TensorCores take alternating row tiles; TILE_N=4096 is
    # ~4.3 MiB double-buffered, fine for v7x's 64 MiB VMEM and below.


if __name__ == "__main__":
    # Module config: DummyModel(batch_size=4) -> fc1 = nn.Linear(4, 10)
    in_features = 4      # Linear's in_features (the module's `batch_size` arg)
    n_rows = 8           # number of samples fed through the layer
    f_in, f_out = in_features, 10

    key = jax.random.PRNGKey(0)
    kx, kw, kb = jax.random.split(key, 3)

    # Deterministic init mimicking nn.Linear uniform(-1/sqrt(fan_in), 1/sqrt(fan_in)).
    bound = 1.0 / jnp.sqrt(jnp.float32(f_in))
    w = jax.random.uniform(kw, (f_out, f_in), jnp.float32, -bound, bound)  # PyTorch [out, in]
    b = jax.random.uniform(kb, (f_out,), jnp.float32, -bound, bound)

    x = jax.random.normal(kx, (n_rows, f_in), jnp.float32)

    # One-time parameter padding (not part of the per-call forward path).
    w_pad, b_pad = init_padded_params(w, b)
    w_pad, b_pad = jax.block_until_ready((w_pad, b_pad))

    out = dummy_model_forward(x, w_pad, b_pad, f_out=f_out)
    out = jax.block_until_ready(out)

    # Reference check in plain JAX.
    ref = jax.nn.sigmoid(x @ w.T + b)
    assert out.shape == (n_rows, f_out)
    assert jnp.allclose(out, ref, atol=1e-5, rtol=1e-5)

    print("KERNEL_OK")
</pallas_src>

<mosaic_0001>
module attributes {stable_mosaic.version = 11 : i64} {
  func.func @_linear_sigmoid_kernel(%arg0: memref<8x4xf32, #tpu.memory_space<vmem>>, %arg1: memref<4x128xf32, #tpu.memory_space<vmem>>, %arg2: memref<1x128xf32, #tpu.memory_space<vmem>>, %arg3: memref<8x128xf32, #tpu.memory_space<vmem>>) attributes {dimension_semantics = [], scalar_prefetch = 0 : i64, scratch_operands = 0 : i64, tpu.core_type = #tpu.core_type<tc>} {
    %c0 = arith.constant 0 : index
    %c0_0 = arith.constant 0 : index
    %0 = vector.load %arg0[%c0, %c0_0] : memref<8x4xf32, #tpu.memory_space<vmem>>, vector<8x4xf32>
    %c0_1 = arith.constant 0 : index
    %c0_2 = arith.constant 0 : index
    %1 = vector.load %arg1[%c0_1, %c0_2] : memref<4x128xf32, #tpu.memory_space<vmem>>, vector<4x128xf32>
    %cst = arith.constant dense<0.000000e+00> : vector<8x128xf32>
    %2 = tpu.matmul %0, %1, %cst {dimension_numbers = #tpu.dot_dimension_numbers<[1], [0], [0], [1], [0, 0, 1, 1], [], []>} : vector<8x4xf32>, vector<4x128xf32>, vector<8x128xf32> -> vector<8x128xf32>
    %c0_3 = arith.constant 0 : index
    %c0_4 = arith.constant 0 : index
    %3 = vector.load %arg2[%c0_3, %c0_4] : memref<1x128xf32, #tpu.memory_space<vmem>>, vector<1x128xf32>
    %4 = vector.broadcast %3 : vector<1x128xf32> to vector<8x128xf32>
    %5 = arith.addf %2, %4 : vector<8x128xf32>
    %cst_5 = arith.constant 5.000000e-01 : f32
    %6 = vector.broadcast %cst_5 : f32 to vector<8x128xf32>
    %7 = arith.mulf %6, %5 : vector<8x128xf32>
    %8 = math.tanh %7 : vector<8x128xf32>
    %cst_6 = arith.constant 1.000000e+00 : f32
    %9 = vector.broadcast %cst_6 : f32 to vector<8x128xf32>
    %10 = arith.addf %8, %9 : vector<8x128xf32>
    %cst_7 = arith.constant 5.000000e-01 : f32
    %11 = vector.broadcast %cst_7 : f32 to vector<8x128xf32>
    %12 = arith.mulf %11, %10 : vector<8x128xf32>
    %c0_8 = arith.constant 0 : index
    %c0_9 = arith.constant 0 : index
    %13 = vector.load %arg3[%c0_8, %c0_9] : memref<8x128xf32, #tpu.memory_space<vmem>>, vector<8x128xf32>
    tpu.vector_store %arg3[%c0_8, %c0_9], %12 {strides = array<i32>} : memref<8x128xf32, #tpu.memory_space<vmem>>, vector<8x128xf32>,
    return
  }
}

</mosaic_0001>

<llo_original>
// kernel: dummy_model_forward.1
$region0: #{dummy_model_forward.1}
  #allocation0 [shape = 'u32[]', space=smem, size = 0x4, offset = 0x4, fixed_abs, tag = 'smem constant byte address 0x4 - core index']
  #allocation1 [shape = 'u32[144,128]{1,0:T(1,128)}', space=vmem, size = 0x12000, scoped, tag = 'internal scratch']
  %s0 = inlined_call_operand.vmem [shape: f32[8,4], index: 0, kind: input, shape index: {}]
  %s1 = inlined_call_operand.vmem [shape: f32[4,128], index: 1, kind: input, shape index: {}]
  %s2 = inlined_call_operand.vmem [shape: f32[1,128], index: 2, kind: input, shape index: {}]
  %s3 = inlined_call_operand.hbm [shape: f32[8,128], index: 3, kind: output, shape index: {}]
  %s4 = sld [smem:[#allocation0]]
  $region22: #{dummy_model_forward.1} parent=0
    _
  %s6 = ssub.s32 1, %s4
  %s7 = scalar_select 0, %s6, %s4
  $region1: #{dummy_model_forward.1} parent=0
    #allocation2 [shape = 'u8[4096]{0}', space=vmem, size = 0x1000, scoped, tag = 'output window, operand 0, single buffered']
    #allocation3 [shape = 's32[1]{0}', space=sflag, size = 0x4, scoped, tag = 'scoped memory for dummy_model_forward.1']
    %8 = vsyncpa [#allocation3], 0
    // Predicated region
    $region2: #{dummy_model_forward.1} parent=1 // pred_check
      _
    $region3: #{dummy_model_forward.1} parent=1 // pred_check_branch
      %10 = sbr.rel (0) target = $region5
    $region4: #{dummy_model_forward.1} parent=1 // pred_region
      _
    $region5: #{dummy_model_forward.1} parent=1 // pred_fallthru
      _
    // Predicated region
    $region6: #{dummy_model_forward.1} parent=1 // pred_check
      _
    $region7: #{dummy_model_forward.1} parent=1 // pred_check_branch
      %12 = sbr.rel (0) target = $region9
    $region8: #{dummy_model_forward.1} parent=1 // pred_region
      _
    $region9: #{dummy_model_forward.1} parent=1 // pred_fallthru
      _
    // Predicated region
    $region10: #{dummy_model_forward.1} parent=1 // pred_check
      _
    $region11: #{dummy_model_forward.1} parent=1 // pred_check_branch
      %14 = sbr.rel (0) target = $region13
    $region12: #{dummy_model_forward.1} parent=1 // pred_region
      _
    $region13: #{dummy_model_forward.1} parent=1 // pred_fallthru
      _
    %v15 = vld [vmem:[%s0] sm:$0xff]
    %v16 = vld [vmem:[%s1] sm:$0xf]
    %v17 = vld [vmem:[%s2] sm:$0x1]
    %v19 = vlaneseq
    %v20 = vshrl.u32 %v19, 7
    %v21 = vsub.s32 0, %v20
    %v22 = vrot.slane %v17, %v21
    %vm24 = vcmask 31744
    %v26 = vsel %vm24, %v15, 0
    %vm28 = vcmask 1043456
    %v30 = vsel %vm28, %v16, 0
    %32 = vmatprep.subr.mxu0 0.0
    %33 = vmatpush1.msra.mxu0 %v30
    %34 = vmatprep.subr.mxu0 0.0
    %35 = vmatpush1.msra.mxu0 0.0
    %36 = vmatprep.subr.mxu0 0.0
    %37 = vmatpush1.msra.mxu0 0.0
    %38 = vmatprep.subr.mxu0 0.0
    %39 = vmatpush1.msra.mxu0 0.0
    %40 = vmatprep.subr.mxu0 0.0
    %41 = vmatpush1.msra.mxu0 0.0
    %42 = vmatprep.subr.mxu0 0.0
    %43 = vmatpush1.msra.mxu0 0.0
    %44 = vmatprep.subr.mxu0 0.0
    %45 = vmatpush1.msra.mxu0 0.0
    %46 = vmatprep.subr.mxu0 0.0
    %47 = vmatpush1.msra.mxu0 0.0
    %48 = vmatprep.subr.mxu0 0.0
    %49 = vmatpush1.msra.mxu0 0.0
    %50 = vmatprep.subr.mxu0 0.0
    %51 = vmatpush1.msra.mxu0 0.0
    %52 = vmatprep.subr.mxu0 0.0
    %53 = vmatpush1.msra.mxu0 0.0
    %54 = vmatprep.subr.mxu0 0.0
    %55 = vmatpush1.msra.mxu0 0.0
    %56 = vmatprep.subr.mxu0 0.0
    %57 = vmatpush1.msra.mxu0 0.0
    %58 = vmatprep.subr.mxu0 0.0
    %59 = vmatpush1.msra.mxu0 0.0
    %60 = vmatprep.subr.mxu0 0.0
    %61 = vmatpush1.msra.mxu0 0.0
    %62 = vmatprep.subr.mxu0 0.0
    %63 = vmatpush1.msra.mxu0 0.0
    %64 = vmatprep.subr.mxu0 0.0
    %65 = vmatpush1.msra.mxu0 0.0
    %66 = vmatprep.subr.mxu0 0.0
    %67 = vmatpush1.msra.mxu0 0.0
    %68 = vmatprep.subr.mxu0 0.0
    %69 = vmatpush1.msra.mxu0 0.0
    %70 = vmatprep.subr.mxu0 0.0
    %71 = vmatpush1.msra.mxu0 0.0
    %72 = vmatprep.subr.mxu0 0.0
    %73 = vmatpush1.msra.mxu0 0.0
    %74 = vmatprep.subr.mxu0 0.0
    %75 = vmatpush1.msra.mxu0 0.0
    %76 = vmatprep.subr.mxu0 0.0
    %77 = vmatpush1.msra.mxu0 0.0
    %78 = vmatprep.subr.mxu0 0.0
    %79 = vmatpush1.msra.mxu0 0.0
    %80 = vmatprep.subr.mxu0 0.0
    %81 = vmatpush1.msra.mxu0 0.0
    %82 = vmatprep.subr.mxu0 0.0
    %83 = vmatpush1.msra.mxu0 0.0
    %84 = vmatprep.subr.mxu0 0.0
    %85 = vmatpush1.msra.mxu0 0.0
    %86 = vmatprep.subr.mxu0 0.0
    %87 = vmatpush1.msra.mxu0 0.0
    %88 = vmatprep.subr.mxu0 0.0
    %89 = vmatpush1.msra.mxu0 0.0
    %90 = vmatprep.subr.mxu0 0.0
    %91 = vmatpush1.msra.mxu0 0.0
    %92 = vmatprep.subr.mxu0 0.0
    %93 = vmatpush1.msra.mxu0 0.0
    %94 = vmatprep.subr.mxu0 0.0
    %95 = vmatpush1.msra.mxu0 0.0
    %96 = vmatprep.mubr.f32.mxu0 0.0
    %97 = vmatmul.mubr.f32.gmra.mrb[0].mxu0 %v26
    %v98 = vpop.f32.mrb[0].mxu0
    %v99 = vadd.f32 %v22, %v98
    %v100 = vpop.f32.mrb[0].mxu0
    %101 = vdwg.mxu0
    %v102 = vmul.f32 %v99, 0.5
    %v103 = vtanh.pop %v102
    %v104 = vadd.f32 %v103, 1.0
    %v105 = vmul.f32 %v104, 0.5
    %106 = vst [vmem:[#allocation2] sm:$0xff] %v105
    // Predicated region
    $region14: #{dummy_model_forward.1} parent=1 // pred_check
      _
    $region15: #{dummy_model_forward.1} parent=1 // pred_check_branch
      %108 = sbr.rel (0) target = $region17
    $region16: #{dummy_model_forward.1} parent=1 // pred_region
      %s110 = ssub.s32 128, 128
      %111 = vsyncadd [#allocation3], %s110
      %s113 = sshll.u32 [#allocation2], 4
      %s114 = int_to_ptr.vmem [resolvable:$true] %s113
      %116 = dma.vmem_to_hbm [thread:$0]  %s114, 128, %s3, [#allocation3]
    $region17: #{dummy_model_forward.1} parent=1 // pred_fallthru
      _
    // Predicated region
    $region18: #{dummy_model_forward.1} parent=1 // pred_check
      _
    $region19: #{dummy_model_forward.1} parent=1 // pred_check_branch
      %118 = sbr.rel (0) target = $region21
    $region20: #{dummy_model_forward.1} parent=1 // pred_region
      %119 = dma.done [#allocation3], 128
    $region21: #{dummy_model_forward.1} parent=1 // pred_fallthru
      _
    %120 = vsyncpa [#allocation3], 1

</llo_original>
